<compile_context>
chip_gen: v5e
topology: v5e:2x2
jax: 0.10.0
libtpu: 0.0.40
codegen_flags: <defaults>
</compile_context>

<pallas_src>
import jax
import jax.numpy as jnp
from jax.experimental import pallas as pl
from jax.experimental.pallas import tpu as pltpu


_LANES = 128
_TARGET_BLOCK_BYTES = 4 * 1024 * 1024    # ~4 MiB per block (roofline plateau)
_SMALL_ELEMS = 64 * 1024                 # below this: single-block fast path
_VMEM_LIMIT_BYTES = 32 * 1024 * 1024     # 4MiB x 2 bufs x (in+out) = 16MiB + scratch


def _exp_kernel(x_ref, o_ref):
    # Elementwise exp on the current VMEM tile (EUP transcendental).
    # The astype handles integer child outputs (no-op for matching dtypes).
    o_ref[...] = jnp.exp(x_ref[...].astype(o_ref.dtype))


def _sublane_multiple(itemsize: int) -> int:
    # f32 -> 8, bf16 -> 16, int8/fp8 -> 32 (sub-32-bit dtypes pack sublanes).
    return max(8, 32 // max(1, itemsize))


def _round_up(x: int, m: int) -> int:
    return ((x + m - 1) // m) * m


def _exp_single_block(x2d: jax.Array, out_dtype) -> jax.Array:
    # Whole array as one VMEM block: no grid, no pipeline overhead.
    return pl.pallas_call(
        _exp_kernel,
        out_shape=jax.ShapeDtypeStruct(x2d.shape, out_dtype),
    )(x2d)


def _exp_tiled(x2d: jax.Array, out_dtype) -> jax.Array:
    rows, lanes = x2d.shape
    itemsize = jnp.dtype(x2d.dtype).itemsize
    sub = _sublane_multiple(itemsize)

    # Byte-based, dtype-aware block rows (rounded down to the sublane multiple).
    max_block_rows = max(sub, (_TARGET_BLOCK_BYTES // (lanes * itemsize)) // sub * sub)

    # Guarantee >= 2 grid steps (even count) so the "parallel" axis can be
    # sharded across both TensorCores on v7x without a 2:1 load imbalance.
    num_blocks = pl.cdiv(rows, max_block_rows)
    if num_blocks < 2:
        num_blocks = 2
    if num_blocks % 2:
        num_blocks += 1
    block_rows = max(sub, _round_up(pl.cdiv(rows, num_blocks), sub))
    grid = (pl.cdiv(rows, block_rows),)

    # Full-width (block_rows, 128) blocks over the contiguous (rows, 128)
    # slab: every DMA is a single contiguous stripe, every store unmasked.
    return pl.pallas_call(
        _exp_kernel,
        out_shape=jax.ShapeDtypeStruct((rows, lanes), out_dtype),
        grid_spec=pltpu.PrefetchScalarGridSpec(
            num_scalar_prefetch=0,
            grid=grid,
            in_specs=[pl.BlockSpec((block_rows, lanes), lambda i: (i, 0))],
            out_specs=pl.BlockSpec((block_rows, lanes), lambda i: (i, 0)),
        ),
        compiler_params=pltpu.CompilerParams(
            dimension_semantics=("parallel",),
            vmem_limit_bytes=_VMEM_LIMIT_BYTES,
        ),
    )(x2d)


def _exp_flat_aligned(x_flat: jax.Array, out_dtype) -> jax.Array:
    """exp of a flat array whose length is a multiple of 128."""
    n = x_flat.size
    rows = n // _LANES
    x2d = x_flat.reshape(rows, _LANES)   # metadata-only reshape (contiguous)
    if n <= _SMALL_ELEMS:
        return _exp_single_block(x2d, out_dtype).reshape(-1)
    return _exp_tiled(x2d, out_dtype).reshape(-1)


def exp_forward(child_value: jax.Array) -> jax.Array:
    """ExpOperationNode.forward: elementwise exp of the child node's output."""
    orig_shape = child_value.shape
    n = child_value.size

    # torch.exp promotes integer inputs to floating point.
    if jnp.issubdtype(child_value.dtype, jnp.floating):
        out_dtype = child_value.dtype
    else:
        out_dtype = jnp.float32

    if n == 0:
        return jnp.zeros(orig_shape, out_dtype)

    x_flat = child_value.reshape(-1)

    if n < _LANES:
        # Tiny tensor: single (1, n) block (only case that isn't lane-dense).
        out = _exp_single_block(x_flat.reshape(1, n), out_dtype)
        return out.reshape(orig_shape)

    main = (n // _LANES) * _LANES
    if main == n:
        return _exp_flat_aligned(x_flat, out_dtype).reshape(orig_shape)

    # Unaligned size: aligned prefix through the lane-dense kernel, the
    # <128-element tail through a tiny single-block call (avoids the former
    # whole-array pad + slice round trips).
    head = _exp_flat_aligned(x_flat[:main], out_dtype)
    tail = _exp_single_block(
        x_flat[main:].reshape(1, n - main), out_dtype
    ).reshape(-1)
    return jnp.concatenate([head, tail]).reshape(orig_shape)


if __name__ == "__main__":
    key = jax.random.PRNGKey(0)
    k_small, k_big = jax.random.split(key)

    # The child node is an arbitrary sub-expression tree; simulated here as a
    # precomputed tensor with the batch's shape.

    # 1) Small NCHW-shaped child output: B=2, C=4, H=16, W=16
    #    (exercises the sublane-dense single-block fast path).
    shape_small = (2, 4, 16, 16)
    child_small = jax.random.normal(k_small, shape_small, dtype=jnp.float32)
    out_small = jax.block_until_ready(exp_forward(child_small))
    assert out_small.shape == shape_small
    assert jnp.allclose(out_small, jnp.exp(child_small), atol=1e-6, rtol=1e-6)

    # 2) Larger child output (exercises the tiled lane-dense path with a
    #    2-step "parallel" grid).
    shape_big = (8, 16, 32, 32)  # 131072 elements, size % 128 == 0
    child_big = jax.random.normal(k_big, shape_big, dtype=jnp.float32)
    out_big = jax.block_until_ready(exp_forward(child_big))
    assert out_big.shape == shape_big
    assert jnp.allclose(out_big, jnp.exp(child_big), atol=1e-6, rtol=1e-6)

    print("KERNEL_OK")
</pallas_src>

<mosaic_0001>
module attributes {stable_mosaic.version = 11 : i64} {
  func.func @_exp_kernel(%arg0: memref<16x128xf32, #tpu.memory_space<vmem>>, %arg1: memref<16x128xf32, #tpu.memory_space<vmem>>) attributes {dimension_semantics = [], scalar_prefetch = 0 : i64, scratch_operands = 0 : i64, tpu.core_type = #tpu.core_type<tc>} {
    %c0 = arith.constant 0 : index
    %c0_0 = arith.constant 0 : index
    %0 = vector.load %arg0[%c0, %c0_0] : memref<16x128xf32, #tpu.memory_space<vmem>>, vector<16x128xf32>
    %1 = math.exp %0 : vector<16x128xf32>
    %c0_1 = arith.constant 0 : index
    %c0_2 = arith.constant 0 : index
    %2 = vector.load %arg1[%c0_1, %c0_2] : memref<16x128xf32, #tpu.memory_space<vmem>>, vector<16x128xf32>
    tpu.vector_store %arg1[%c0_1, %c0_2], %1 {strides = array<i32>} : memref<16x128xf32, #tpu.memory_space<vmem>>, vector<16x128xf32>,
    return
  }
}

</mosaic_0001>

<llo_original>
// kernel: tpu_custom_call.1
$region0: #{tpu_custom_call.1}
  #allocation0 [shape = 'u32[]', space=smem, size = 0x4, offset = 0x4, fixed_abs, tag = 'smem constant byte address 0x4 - core index']
  #allocation1 [shape = 'u32[72,128]{1,0:T(1,128)}', space=vmem, size = 0x9000, scoped, tag = 'internal scratch']
  %s0 = inlined_call_operand.hbm [shape: f32[16,128], index: 0, kind: input, shape index: {}]
  %s1 = inlined_call_operand.hbm [shape: f32[16,128], index: 1, kind: output, shape index: {}]
  %s2 = sld [smem:[#allocation0]]
  $region18: #{tpu_custom_call.1} parent=0
    _
  %s4 = ssub.s32 1, %s2
  %s5 = scalar_select 0, %s4, %s2
  $region1: #{tpu_custom_call.1} parent=0
    #allocation2 [shape = 'u8[8192]{0}', space=vmem, size = 0x2000, scoped, tag = 'input window, operand 0, single buffered']
    #allocation3 [shape = 's32[1]{0}', space=sflag, size = 0x4, scoped, tag = 'scoped memory for tpu_custom_call.1']
    #allocation4 [shape = 's32[1]{0}', space=sflag, size = 0x4, scoped, tag = 'scoped memory for tpu_custom_call.1']
    #allocation5 [shape = 'u8[8192]{0}', space=vmem, size = 0x2000, scoped, tag = 'output window, operand 0, single buffered']
    %6 = vsyncpa [#allocation3], 0
    %7 = vsyncpa [#allocation4], 0
    // Predicated region
    $region2: #{tpu_custom_call.1} parent=1 // pred_check
      _
    $region3: #{tpu_custom_call.1} parent=1 // pred_check_branch
      %9 = sbr.rel (0) target = $region5
    $region4: #{tpu_custom_call.1} parent=1 // pred_region
      %11 = vsyncadd [#allocation3], 0
      %s12 = sshll.u32 %s0, 4
      %s13 = int_to_ptr.hbm [resolvable:$true] %s12
      %s14 = sshll.u32 [#allocation2], 4
      %s15 = int_to_ptr.vmem [resolvable:$true] %s14
      %20 = dma.hbm_to_vmem [thread:$0]  %s13, 256, %s15, [#allocation3], 128, 128, 8
    $region5: #{tpu_custom_call.1} parent=1 // pred_fallthru
      _
    // Predicated region
    $region6: #{tpu_custom_call.1} parent=1 // pred_check
      _
    $region7: #{tpu_custom_call.1} parent=1 // pred_check_branch
      %22 = sbr.rel (0) target = $region9
    $region8: #{tpu_custom_call.1} parent=1 // pred_region
      %24 = dma.done [#allocation3], 256
    $region9: #{tpu_custom_call.1} parent=1 // pred_fallthru
      _
    %v25 = vld [vmem:[#allocation2] sm:$0xff]
    %v26 = vld [vmem:[#allocation2 + $0x8] sm:$0xff]
    %v27 = vmul.f32 %v25, 1.442695
    %v28 = vpow.pop %v27
    %v29 = vmul.f32 %v26, 1.442695
    %v30 = vpow.pop %v29
    %31 = vst [vmem:[#allocation5] sm:$0xff] %v28
    %32 = vst [vmem:[#allocation5 + $0x8] sm:$0xff] %v30
    // Predicated region
    $region10: #{tpu_custom_call.1} parent=1 // pred_check
      _
    $region11: #{tpu_custom_call.1} parent=1 // pred_check_branch
      %34 = sbr.rel (0) target = $region13
    $region12: #{tpu_custom_call.1} parent=1 // pred_region
      %36 = vsyncadd [#allocation4], 0
      %s37 = sshll.u32 [#allocation5], 4
      %s38 = int_to_ptr.vmem [resolvable:$true] %s37
      %s39 = sshll.u32 %s1, 4
      %s40 = int_to_ptr.hbm [resolvable:$true] %s39
      %45 = dma.vmem_to_hbm [thread:$0]  %s38, 256, %s40, [#allocation4], 128, 128, 8
    $region13: #{tpu_custom_call.1} parent=1 // pred_fallthru
      _
    // Predicated region
    $region14: #{tpu_custom_call.1} parent=1 // pred_check
      _
    $region15: #{tpu_custom_call.1} parent=1 // pred_check_branch
      %47 = sbr.rel (0) target = $region17
    $region16: #{tpu_custom_call.1} parent=1 // pred_region
      %49 = dma.done [#allocation4], 256
    $region17: #{tpu_custom_call.1} parent=1 // pred_fallthru
      _
    %50 = vsyncpa [#allocation3], 1
    %51 = vsyncpa [#allocation4], 1

</llo_original>
